<compile_context>
chip_gen: v6e
topology: v6e:2x2x1
jax: 0.10.0
libtpu: 0.0.40
codegen_flags: <defaults>
</compile_context>

<pallas_src>
import jax
import jax.numpy as jnp
from jax.experimental import pallas as pl
from jax.experimental.pallas import tpu as pltpu


def _round_up(n, m):
    return ((n + m - 1) // m) * m


def linear_regression_kernel(x_ref, w_ref, b_ref, o_ref):
    """One batch tile: o = x @ w + b   (x: (TB, F), w: (F, 1), b: (1, 1))."""
    out = jnp.dot(x_ref[...], w_ref[...],
                  preferred_element_type=jnp.float32) + b_ref[...]
    o_ref[...] = out.astype(o_ref.dtype)


def linear_regression_forward(x, w, b, *, block_b=1024):
    """x: (B, X, Y) float32; w: (X*Y, 1); b: (1, 1).  Returns (B, 1) float32."""
    B = x.shape[0]
    x2d = x.reshape(B, -1)
    in_features = x2d.shape[1]

    # Batch tile: multiple of 8 (sublane), capped so double-buffered x tiles
    # stay far below the scoped VMEM limit on every generation (incl. v7x).
    TB = min(block_b, _round_up(B, 8))
    TB = _round_up(TB, 8)
    Bp = _round_up(B, TB)
    if Bp != B:
        x2d = jnp.pad(x2d, ((0, Bp - B), (0, 0)))

    grid = (Bp // TB,)

    cost = pl.CostEstimate(
        flops=2 * Bp * in_features,
        transcendentals=0,
        bytes_accessed=(Bp * in_features * 4          # x stream
                        + in_features * 4 + 4          # resident w, b
                        + Bp * 4),                     # output
    )

    out = pl.pallas_call(
        linear_regression_kernel,
        out_shape=jax.ShapeDtypeStruct((Bp, 1), jnp.float32),
        grid=grid,
        in_specs=[
            # x: streamed per batch tile (double-buffered by Pallas).
            pl.BlockSpec((TB, in_features), lambda i: (i, 0)),
            # w, b: constant index_map -> fetched once, resident in VMEM.
            pl.BlockSpec((in_features, 1), lambda i: (0, 0)),
            pl.BlockSpec((1, 1), lambda i: (0, 0)),
        ],
        out_specs=pl.BlockSpec((TB, 1), lambda i: (i, 0)),
        compiler_params=pltpu.CompilerParams(
            dimension_semantics=("parallel",),
            vmem_limit_bytes=32 * 1024 * 1024,
        ),
        cost_estimate=cost,
    )(x2d, w, b)

    return out[:B]


def init_params(key, in_features):
    """nn.Linear-style init U(-1/sqrt(fan_in), 1/sqrt(fan_in)).

    Weight returned as (in_features, 1); bias as (1, 1)."""
    kw, kb = jax.random.split(key)
    bound = 1.0 / jnp.sqrt(jnp.float32(in_features))
    w = jax.random.uniform(kw, (in_features, 1), jnp.float32, -bound, bound)
    b = jax.random.uniform(kb, (1, 1), jnp.float32, -bound, bound)
    return w, b


def reference_forward(x, w, b):
    """Pure-JAX reference matching the PyTorch module."""
    return x.reshape(x.shape[0], -1) @ w + b


if __name__ == "__main__":
    # Small shapes consistent with the module: x=16, y=16 -> in_features=256.
    # B=64 with block_b=32 exercises a 2-step batch grid.
    B, X, Y = 64, 16, 16
    key = jax.random.PRNGKey(0)
    key, kx = jax.random.split(key)
    x = jax.random.normal(kx, (B, X, Y), jnp.float32)

    w, b = init_params(key, X * Y)

    out = linear_regression_forward(x, w, b, block_b=32)
    out = jax.block_until_ready(out)

    ref = reference_forward(x, w, b)
    assert out.shape == (B, 1), out.shape
    assert jnp.allclose(out, ref, atol=1e-4, rtol=1e-4), \
        f"mismatch: max abs err {jnp.max(jnp.abs(out - ref))}"

    print("KERNEL_OK")
</pallas_src>

<mosaic_0001>
module attributes {stable_mosaic.version = 11 : i64} {
  func.func @linear_regression_kernel(%arg0: i32, %arg1: memref<32x256xf32, #tpu.memory_space<vmem>>, %arg2: memref<256x1xf32, #tpu.memory_space<vmem>>, %arg3: memref<1x1xf32, #tpu.memory_space<vmem>>, %arg4: memref<32x1xf32, #tpu.memory_space<vmem>>) attributes {dimension_semantics = [#tpu.dimension_semantics<parallel>], iteration_bounds = array<i64: 2>, scalar_prefetch = 0 : i64, scratch_operands = 0 : i64, tpu.core_type = #tpu.core_type<tc>, window_params = [{transform_indices = @transform_0, window_bounds = array<i64: 32, 256>}, {pipeline_mode = #tpu.pipeline_mode<synchronous>, transform_indices = @transform_1, window_bounds = array<i64: 256, 1>}, {pipeline_mode = #tpu.pipeline_mode<synchronous>, transform_indices = @transform_2, window_bounds = array<i64: 1, 1>}, {transform_indices = @transform_3, window_bounds = array<i64: 32, 1>}]} {
    %c0 = arith.constant 0 : index
    %c0_0 = arith.constant 0 : index
    %0 = vector.load %arg1[%c0, %c0_0] : memref<32x256xf32, #tpu.memory_space<vmem>>, vector<32x256xf32>
    %c0_1 = arith.constant 0 : index
    %c0_2 = arith.constant 0 : index
    %1 = vector.load %arg2[%c0_1, %c0_2] : memref<256x1xf32, #tpu.memory_space<vmem>>, vector<256x1xf32>
    %cst = arith.constant dense<0.000000e+00> : vector<32x1xf32>
    %2 = tpu.matmul %0, %1, %cst {dimension_numbers = #tpu.dot_dimension_numbers<[1], [0], [0], [1], [0, 0, 1, 1], [], []>} : vector<32x256xf32>, vector<256x1xf32>, vector<32x1xf32> -> vector<32x1xf32>
    %c0_3 = arith.constant 0 : index
    %c0_4 = arith.constant 0 : index
    %3 = vector.load %arg3[%c0_3, %c0_4] : memref<1x1xf32, #tpu.memory_space<vmem>>, vector<1x1xf32>
    %4 = vector.broadcast %3 : vector<1x1xf32> to vector<32x1xf32>
    %5 = arith.addf %2, %4 : vector<32x1xf32>
    %c0_5 = arith.constant 0 : index
    %c0_6 = arith.constant 0 : index
    %6 = vector.load %arg4[%c0_5, %c0_6] : memref<32x1xf32, #tpu.memory_space<vmem>>, vector<32x1xf32>
    tpu.vector_store %arg4[%c0_5, %c0_6], %5 {strides = array<i32>} : memref<32x1xf32, #tpu.memory_space<vmem>>, vector<32x1xf32>,
    return
  }
  func.func @transform_0(%arg0: i32) -> (i32, i32) {
    %c0_i32 = arith.constant 0 : i32
    %c0_i32_0 = arith.constant 0 : i32
    return %arg0, %c0_i32 : i32, i32
  }
  func.func @transform_1(%arg0: i32) -> (i32, i32) {
    %c0_i32 = arith.constant 0 : i32
    %c0_i32_0 = arith.constant 0 : i32
    %c0_i32_1 = arith.constant 0 : i32
    return %c0_i32, %c0_i32_0 : i32, i32
  }
  func.func @transform_2(%arg0: i32) -> (i32, i32) {
    %c0_i32 = arith.constant 0 : i32
    %c0_i32_0 = arith.constant 0 : i32
    %c0_i32_1 = arith.constant 0 : i32
    return %c0_i32, %c0_i32_0 : i32, i32
  }
  func.func @transform_3(%arg0: i32) -> (i32, i32) {
    %c0_i32 = arith.constant 0 : i32
    %c0_i32_0 = arith.constant 0 : i32
    return %arg0, %c0_i32 : i32, i32
  }
}

</mosaic_0001>

<llo_original>
// kernel: tpu_custom_call.1
$region0: #{tpu_custom_call.1}
  #allocation0 [shape = 'u32[]', space=smem, size = 0x4, offset = 0x4, fixed_abs, tag = 'smem constant byte address 0x4 - core index']
  #allocation1 [shape = 'u32[144,128]{1,0:T(1,128)}', space=vmem, size = 0x12000, scoped, tag = 'internal scratch']
  #allocation2 [shape = 'f32[1,1]{1,0:T(1,128)S(1)}', space=vmem, size = 0x200, scoped, tag = 'scoped memory for tpu_custom_call.1']
  %s0 = inlined_call_operand.vmem [shape: f32[64,256], index: 0, kind: input, shape index: {}]
  %s1 = inlined_call_operand.vmem [shape: f32[256,1], index: 1, kind: input, shape index: {}]
  %s2 = inlined_call_operand.<no memory space> [shape: f32[1,1], index: 2, kind: input, shape index: {}]
  %s3 = inlined_call_operand.vmem [shape: f32[64,1], index: 3, kind: output, shape index: {}]
  %s4 = sld [smem:[#allocation0]]
  $region45: #{tpu_custom_call.1} parent=0
    _
  %s6 = ssub.s32 1, %s4
  %s7 = scalar_select 0, %s6, %s4
  %v8 = vstv %s2
  %9 = vst [vmem:[#allocation2] sm:$0x1] %v8
  loop: start=0, step=1, limit=4
  $region2: #{tpu_custom_call.1} parent=0 // loop_pre_header
    _
  $region3: #{tpu_custom_call.1} parent=0 // loop_header
    %s11 = sphi 0, %s15
    %p12 = scmp.ge.s32.totalorder %s11, 4
    %s21 = sphi 0, %s23
    %s24 = sphi 0, %s21
    %s25 = sphi 0, %s24
    %s41 = sphi 0, %s25
    %s45 = sphi 0, %s45
    %s47 = sphi 0, %s45
    %s48 = sphi 0, %s47
    %s62 = sphi 0, %s48
    %s66 = sphi 0, %s66
    %s68 = sphi 0, %s66
    %s69 = sphi 0, %s68
    %s83 = sphi 0, %s69
    %s89 = sphi 0, %s91
    %s92 = sphi 0, %s89
    %s93 = sphi 0, %s92
    %s109 = sphi 0, %s93
  $region4: #{tpu_custom_call.1} parent=0 // loop_header_branch
    %14 = sbr.rel (%p12) target = $region8
  $region5: #{tpu_custom_call.1} parent=0 // loop_body
    %s16 = ssub.s32 %s11, 1
    %s17 = ssub.s32 %s11, 2
    %s18 = sadd.s32 %s11, 1
    %s19 = ssub.s32 %s11, %s18
    %p20 = scmp.eq.s32.totalorder %s19, 0
    %s22 = sadd.s32 %s21, 1
    %s23 = scalar_select %p20, %s21, %s22
    %p26 = pneg %p20
    %p27 = scmp.eq.s32.totalorder %s11, 1
    %p28 = por %p26, %p27
    %p29 = scmp.ne.s32.totalorder %s21, %s24
    %p30 = scmp.eq.s32.totalorder %s11, 0
    %p31 = por %p29, %p30
    %p32 = scmp.ne.s32.totalorder %s21, %s24
    %p33 = scmp.eq.s32.totalorder %s16, 1
    %p34 = por %p32, %p33
    %p35 = scmp.ne.s32.totalorder %s24, %s25
    %p36 = scmp.eq.s32.totalorder %s16, 0
    %p37 = por %p35, %p36
    %p38 = scmp.ne.s32.totalorder %s24, %s25
    %p39 = scmp.eq.s32.totalorder %s17, 1
    %p40 = por %p38, %p39
    %p42 = scmp.ne.s32.totalorder %s25, %s41
    %p43 = scmp.eq.s32.totalorder %s17, 0
    %p44 = por %p42, %p43
    %s46 = sadd.s32 %s45, 1
    %p49 = scmp.eq.s32.totalorder %s11, 1
    %p50 = scmp.ne.s32.totalorder %s45, %s47
    %p51 = scmp.eq.s32.totalorder %s11, 0
    %p52 = por %p50, %p51
    %p53 = scmp.ne.s32.totalorder %s45, %s47
    %p54 = scmp.eq.s32.totalorder %s16, 1
    %p55 = por %p53, %p54
    %p56 = scmp.ne.s32.totalorder %s47, %s48
    %p57 = scmp.eq.s32.totalorder %s16, 0
    %p58 = por %p56, %p57
    %p59 = scmp.ne.s32.totalorder %s47, %s48
    %p60 = scmp.eq.s32.totalorder %s17, 1
    %p61 = por %p59, %p60
    %p63 = scmp.ne.s32.totalorder %s48, %s62
    %p64 = scmp.eq.s32.totalorder %s17, 0
    %p65 = por %p63, %p64
    %s67 = sadd.s32 %s66, 1
    %p70 = scmp.eq.s32.totalorder %s11, 1
    %p71 = scmp.ne.s32.totalorder %s66, %s68
    %p72 = scmp.eq.s32.totalorder %s11, 0
    %p73 = por %p71, %p72
    %p74 = scmp.ne.s32.totalorder %s66, %s68
    %p75 = scmp.eq.s32.totalorder %s16, 1
    %p76 = por %p74, %p75
    %p77 = scmp.ne.s32.totalorder %s68, %s69
    %p78 = scmp.eq.s32.totalorder %s16, 0
    %p79 = por %p77, %p78
    %p80 = scmp.ne.s32.totalorder %s68, %s69
    %p81 = scmp.eq.s32.totalorder %s17, 1
    %p82 = por %p80, %p81
    %p84 = scmp.ne.s32.totalorder %s69, %s83
    %p85 = scmp.eq.s32.totalorder %s17, 0
    %p86 = por %p84, %p85
    %s87 = ssub.s32 %s11, %s18
    %p88 = scmp.eq.s32.totalorder %s87, 0
    %s90 = sadd.s32 %s89, 1
    %s91 = scalar_select %p88, %s89, %s90
    %p94 = pneg %p88
    %p95 = scmp.eq.s32.totalorder %s11, 1
    %p96 = por %p94, %p95
    %p97 = scmp.ne.s32.totalorder %s89, %s92
    %p98 = scmp.eq.s32.totalorder %s11, 0
    %p99 = por %p97, %p98
    %p100 = scmp.ne.s32.totalorder %s89, %s92
    %p101 = scmp.eq.s32.totalorder %s16, 1
    %p102 = por %p100, %p101
    %p103 = scmp.ne.s32.totalorder %s92, %s93
    %p104 = scmp.eq.s32.totalorder %s16, 0
    %p105 = por %p103, %p104
    %p106 = scmp.ne.s32.totalorder %s92, %s93
    %p107 = scmp.eq.s32.totalorder %s17, 1
    %p108 = por %p106, %p107
    %p110 = scmp.ne.s32.totalorder %s93, %s109
    %p111 = scmp.eq.s32.totalorder %s17, 0
    %p112 = por %p110, %p111
    %p113 = scmp.le.s32.totalorder 1, %s11
    %p114 = scmp.lt.s32.totalorder %s11, 3
    %p115 = pnand %p113, %p114
    %p116 = pneg %p115
    // Predicated region
    $region9: #{tpu_custom_call.1} parent=5 // pred_check
      _
    $region10: #{tpu_custom_call.1} parent=5 // pred_check_branch
      %118 = sbr.rel (%p115) target = $region12
    $region11: #{tpu_custom_call.1} parent=5 // pred_region
      %s119 = ssub.s32 %s11, 1
      // Predicated region
      $region13: #{tpu_custom_call.1} parent=11 // pred_check
        %p120 = pneg %p58
      $region14: #{tpu_custom_call.1} parent=11 // pred_check_branch
        %122 = sbr.rel (%p120) target = $region16
      $region15: #{tpu_custom_call.1} parent=11 // pred_region
        _
      $region16: #{tpu_custom_call.1} parent=11 // pred_fallthru
        _
      // Predicated region
      $region17: #{tpu_custom_call.1} parent=11 // pred_check
        %p123 = pneg %p79
      $region18: #{tpu_custom_call.1} parent=11 // pred_check_branch
        %125 = sbr.rel (%p123) target = $region20
      $region19: #{tpu_custom_call.1} parent=11 // pred_region
        _
      $region20: #{tpu_custom_call.1} parent=11 // pred_fallthru
        _
    $region12: #{tpu_custom_call.1} parent=5 // pred_fallthru
      _
    %p126 = scmp.lt.s32.totalorder %s11, 2
    // Predicated region
    $region21: #{tpu_custom_call.1} parent=5 // pred_check
      %p127 = pneg %p126
    $region22: #{tpu_custom_call.1} parent=5 // pred_check_branch
      %129 = sbr.rel (%p127) target = $region24
    $region23: #{tpu_custom_call.1} parent=5 // pred_region
      // Predicated region
      $region25: #{tpu_custom_call.1} parent=23 // pred_check
        %p130 = pneg %p31
      $region26: #{tpu_custom_call.1} parent=23 // pred_check_branch
        %132 = sbr.rel (%p130) target = $region28
      $region27: #{tpu_custom_call.1} parent=23 // pred_region
        %s133 = smul.u32 4, %s11
        %p134 = scmp.lt.s32.totalorder %s133, 7
        %s135 = scalar_select %p134, %s133, 7
        %s136 = smul.addr %s135, 2
        %s137 = smul.addr %s136, 8
        %s138 = scalar_lea.vmem %s0, %s137
        %s139 = smul.u32 4, %s11
      $region28: #{tpu_custom_call.1} parent=23 // pred_fallthru
        _
    $region24: #{tpu_custom_call.1} parent=5 // pred_fallthru
      _
    %p140 = scmp.le.s32.totalorder 1, %s11
    %p141 = scmp.lt.s32.totalorder %s11, 3
    %p142 = pnand %p140, %p141
    %p143 = pneg %p142
    // Predicated region
    $region29: #{tpu_custom_call.1} parent=5 // pred_check
      _
    $region30: #{tpu_custom_call.1} parent=5 // pred_check_branch
      %145 = sbr.rel (%p142) target = $region32
    $region31: #{tpu_custom_call.1} parent=5 // pred_region
      %s146 = ssub.s32 %s11, 1
      %s147 = smul.u32 4, %s16
      %p148 = scmp.lt.s32.totalorder %s147, 7
      %s149 = scalar_select %p148, %s147, 7
      %s150 = smul.addr %s149, 2
      %s151 = smul.addr %s150, 8
      %s152 = scalar_lea.vmem %s0, %s151
      %p153 = pneg %p37
      %p154 = pneg %p34
      %p155 = pneg %p58
      %p156 = pneg %p55
      %p157 = pneg %p79
      %p158 = pneg %p76
      %p159 = pneg %p105
      %p160 = pneg %p102
      %s161 = smul.u32 4, %s16
      %p162 = scmp.lt.s32.totalorder %s161, 7
      %s163 = scalar_select %p162, %s161, 7
      %s164 = smul.addr %s163, 8
      %s165 = scalar_lea.vmem %s3, %s164
      %s166 = smul.u32 4, %s16
      %p167 = scmp.lt.s32.totalorder %s166, 7
      %s168 = scalar_select %p167, %s166, 7
      %s169 = smul.addr %s168, 2
      %s170 = smul.addr %s169, 8
      %s171 = scalar_lea.vmem %s0, %s170
      %s172 = smul.u32 4, %s16
      %s173 = smul.u32 4, %s16
      %p174 = scmp.lt.s32.totalorder %s173, 7
      %s175 = scalar_select %p174, %s173, 7
      %s176 = smul.addr %s175, 8
      %s177 = scalar_lea.vmem %s3, %s176
      %s178 = smul.u32 4, %s16
      %v179 = vld [vmem:[%s171] sm:$0xff]
      %v180 = vld [vmem:[%s171 + $0x8] sm:$0xff]
      %v181 = vld [vmem:[%s171 + $0x10] sm:$0xff]
      %v182 = vld [vmem:[%s171 + $0x18] sm:$0xff]
      %v183 = vld [vmem:[%s171 + $0x20] sm:$0xff]
      %v184 = vld [vmem:[%s171 + $0x28] sm:$0xff]
      %v185 = vld [vmem:[%s171 + $0x30] sm:$0xff]
      %v186 = vld [vmem:[%s171 + $0x38] sm:$0xff]
      %v187 = vld [vmem:[%s1] sm:$0xff]
      %v188 = vld [vmem:[%s1 + $0x8] sm:$0xff]
      %v189 = vld [vmem:[%s1 + $0x10] sm:$0xff]
      %v190 = vld [vmem:[%s1 + $0x18] sm:$0xff]
      %v191 = vld [vmem:[%s1 + $0x20] sm:$0xff]
      %v192 = vld [vmem:[%s1 + $0x28] sm:$0xff]
      %v193 = vld [vmem:[%s1 + $0x30] sm:$0xff]
      %v194 = vld [vmem:[%s1 + $0x38] sm:$0xff]
      %v195 = vld [vmem:[%s1 + $0x40] sm:$0xff]
      %v196 = vld [vmem:[%s1 + $0x48] sm:$0xff]
      %v197 = vld [vmem:[%s1 + $0x50] sm:$0xff]
      %v198 = vld [vmem:[%s1 + $0x58] sm:$0xff]
      %v199 = vld [vmem:[%s1 + $0x60] sm:$0xff]
      %v200 = vld [vmem:[%s1 + $0x68] sm:$0xff]
      %v201 = vld [vmem:[%s1 + $0x70] sm:$0xff]
      %v202 = vld [vmem:[%s1 + $0x78] sm:$0xff]
      %v203 = vld [vmem:[%s1 + $0x80] sm:$0xff]
      %v204 = vld [vmem:[%s1 + $0x88] sm:$0xff]
      %v205 = vld [vmem:[%s1 + $0x90] sm:$0xff]
      %v206 = vld [vmem:[%s1 + $0x98] sm:$0xff]
      %v207 = vld [vmem:[%s1 + $0xa0] sm:$0xff]
      %v208 = vld [vmem:[%s1 + $0xa8] sm:$0xff]
      %v209 = vld [vmem:[%s1 + $0xb0] sm:$0xff]
      %v210 = vld [vmem:[%s1 + $0xb8] sm:$0xff]
      %v211 = vld [vmem:[%s1 + $0xc0] sm:$0xff]
      %v212 = vld [vmem:[%s1 + $0xc8] sm:$0xff]
      %v213 = vld [vmem:[%s1 + $0xd0] sm:$0xff]
      %v214 = vld [vmem:[%s1 + $0xd8] sm:$0xff]
      %v215 = vld [vmem:[%s1 + $0xe0] sm:$0xff]
      %v216 = vld [vmem:[%s1 + $0xe8] sm:$0xff]
      %v217 = vld [vmem:[%s1 + $0xf0] sm:$0xff]
      %v218 = vld [vmem:[%s1 + $0xf8] sm:$0xff]
      %v219 = vld [vmem:[#allocation2] sm:$0x1]
      %v221 = vlaneseq
      %v222 = vshrl.u32 %v221, 7
      %v223 = vsub.s32 0, %v222
      %v224 = vrot.slane %v219, %v223
      %226 = vmatprep.subr.mxu0 0.0
      %227 = vmatpush1.msra.mxu0 %v202
      %228 = vmatprep.subr.mxu0 0.0
      %229 = vmatpush1.msra.mxu0 %v201
      %230 = vmatprep.subr.mxu0 0.0
      %231 = vmatpush1.msra.mxu0 %v200
      %232 = vmatprep.subr.mxu0 0.0
      %233 = vmatpush1.msra.mxu0 %v199
      %234 = vmatprep.subr.mxu0 0.0
      %235 = vmatpush1.msra.mxu0 %v198
      %236 = vmatprep.subr.mxu0 0.0
      %237 = vmatpush1.msra.mxu0 %v197
      %238 = vmatprep.subr.mxu0 0.0
      %239 = vmatpush1.msra.mxu0 %v196
      %240 = vmatprep.subr.mxu0 0.0
      %241 = vmatpush1.msra.mxu0 %v195
      %242 = vmatprep.subr.mxu0 0.0
      %243 = vmatpush1.msra.mxu0 %v194
      %244 = vmatprep.subr.mxu0 0.0
      %245 = vmatpush1.msra.mxu0 %v193
      %246 = vmatprep.subr.mxu0 0.0
      %247 = vmatpush1.msra.mxu0 %v192
      %248 = vmatprep.subr.mxu0 0.0
      %249 = vmatpush1.msra.mxu0 %v191
      %250 = vmatprep.subr.mxu0 0.0
      %251 = vmatpush1.msra.mxu0 %v190
      %252 = vmatprep.subr.mxu0 0.0
      %253 = vmatpush1.msra.mxu0 %v189
      %254 = vmatprep.subr.mxu0 0.0
      %255 = vmatpush1.msra.mxu0 %v188
      %256 = vmatprep.subr.mxu0 0.0
      %257 = vmatpush1.msra.mxu0 %v187
      %258 = vmatprep.subr.mxu0 0.0
      %259 = vmatpush2.msra.mxu0 %v218
      %260 = vmatprep.subr.mxu0 0.0
      %261 = vmatpush2.msra.mxu0 %v217
      %262 = vmatprep.subr.mxu0 0.0
      %263 = vmatpush2.msra.mxu0 %v216
      %264 = vmatprep.subr.mxu0 0.0
      %265 = vmatpush2.msra.mxu0 %v215
      %266 = vmatprep.subr.mxu0 0.0
      %267 = vmatpush2.msra.mxu0 %v214
      %268 = vmatprep.subr.mxu0 0.0
      %269 = vmatpush2.msra.mxu0 %v213
      %270 = vmatprep.subr.mxu0 0.0
      %271 = vmatpush2.msra.mxu0 %v212
      %272 = vmatprep.subr.mxu0 0.0
      %273 = vmatpush2.msra.mxu0 %v211
      %274 = vmatprep.subr.mxu0 0.0
      %275 = vmatpush2.msra.mxu0 %v210
      %276 = vmatprep.subr.mxu0 0.0
      %277 = vmatpush2.msra.mxu0 %v209
      %278 = vmatprep.subr.mxu0 0.0
      %279 = vmatpush2.msra.mxu0 %v208
      %280 = vmatprep.subr.mxu0 0.0
      %281 = vmatpush2.msra.mxu0 %v207
      %282 = vmatprep.subr.mxu0 0.0
      %283 = vmatpush2.msra.mxu0 %v206
      %284 = vmatprep.subr.mxu0 0.0
      %285 = vmatpush2.msra.mxu0 %v205
      %286 = vmatprep.subr.mxu0 0.0
      %287 = vmatpush2.msra.mxu0 %v204
      %288 = vmatprep.subr.mxu0 0.0
      %289 = vmatpush2.msra.mxu0 %v203
      %290 = vmatprep.mubr.f32.mxu0 %v180
      %291 = vmatmul.mubr.f32.gmra.mxu0 %v179
      %v292 = vpop.f32.mrf.mxu0
      %v293 = vadd.f32 %v224, %v292
      %v294 = vpop.f32.mrf.mxu0
      %295 = vmatprep.mubr.f32.mxu0 %v182
      %296 = vmatmul.mubr.f32.gmra.mxu0 %v181
      %v297 = vpop.f32.mrf.mxu0
      %v298 = vadd.f32 %v224, %v297
      %v299 = vpop.f32.mrf.mxu0
      %300 = vmatprep.mubr.f32.mxu0 %v184
      %301 = vmatmul.mubr.f32.gmra.mxu0 %v183
      %v302 = vpop.f32.mrf.mxu0
      %v303 = vadd.f32 %v224, %v302
      %v304 = vpop.f32.mrf.mxu0
      %305 = vmatprep.mubr.f32.mxu0 %v186
      %306 = vmatmul.mubr.f32.gmra.mxu0 %v185
      %v307 = vpop.f32.mrf.mxu0
      %v308 = vadd.f32 %v224, %v307
      %v309 = vpop.f32.mrf.mxu0
      %310 = vdwg.mxu0
      %vm311 = vcmask 7168
      %312 = vst.msk [vmem:[%s177] sm:$0xff] %vm311, %v293
      %313 = vst.msk [vmem:[%s177 + $0x8] sm:$0xff] %vm311, %v298
      %314 = vst.msk [vmem:[%s177 + $0x10] sm:$0xff] %vm311, %v303
      %315 = vst.msk [vmem:[%s177 + $0x18] sm:$0xff] %vm311, %v308
      %s316 = smul.u32 4, %s16
      %p317 = scmp.lt.s32.totalorder %s316, 7
      %s318 = scalar_select %p317, %s316, 7
      %s319 = smul.addr %s318, 8
      %s320 = scalar_lea.vmem %s3, %s319
      // Predicated region
      $region33: #{tpu_custom_call.1} parent=31 // pred_check
        %p321 = pneg %p102
      $region34: #{tpu_custom_call.1} parent=31 // pred_check_branch
        %323 = sbr.rel (%p321) target = $region36
      $region35: #{tpu_custom_call.1} parent=31 // pred_region
        %s324 = smul.u32 4, %s16
      $region36: #{tpu_custom_call.1} parent=31 // pred_fallthru
        _
    $region32: #{tpu_custom_call.1} parent=5 // pred_fallthru
      _
    %p325 = scmp.le.s32.totalorder 2, %s11
    // Predicated region
    $region37: #{tpu_custom_call.1} parent=5 // pred_check
      %p326 = pneg %p325
    $region38: #{tpu_custom_call.1} parent=5 // pred_check_branch
      %328 = sbr.rel (%p326) target = $region40
    $region39: #{tpu_custom_call.1} parent=5 // pred_region
      %s329 = ssub.s32 %s11, 2
      // Predicated region
      $region41: #{tpu_custom_call.1} parent=39 // pred_check
        %p330 = pneg %p108
      $region42: #{tpu_custom_call.1} parent=39 // pred_check_branch
        %332 = sbr.rel (%p330) target = $region44
      $region43: #{tpu_custom_call.1} parent=39 // pred_region
        %s333 = smul.u32 4, %s17
        %p334 = scmp.lt.s32.totalorder %s333, 7
        %s335 = scalar_select %p334, %s333, 7
        %s336 = smul.addr %s335, 8
        %s337 = scalar_lea.vmem %s3, %s336
      $region44: #{tpu_custom_call.1} parent=39 // pred_fallthru
        _
    $region40: #{tpu_custom_call.1} parent=5 // pred_fallthru
      _
  $region6: #{tpu_custom_call.1} parent=0 // loop_footer
    %s15 = sadd.s32 1, %s11
  $region7: #{tpu_custom_call.1} parent=0 // loop_footer_branch
    %10 = sbr.rel target = $region3
  $region8: #{tpu_custom_call.1} parent=0 // loop_exit
    _

</llo_original>
